<compile_context>
chip_gen: v7x
topology: tpu7x:2x2x1
jax: 0.10.0
libtpu: 0.0.40
codegen_flags: <defaults>
</compile_context>

<pallas_src>
import jax
import jax.numpy as jnp
from jax.experimental import pallas as pl
from jax.experimental.pallas import tpu as pltpu


def _round_up(n: int, m: int) -> int:
    return ((n + m - 1) // m) * m


def _pick_lane(num_states: int) -> int:
    """N-dim alignment for the padded hidden dim: 256 on v6e/v7x MXUs
    (2x256^2) when the feature dim is big enough to matter, else 128."""
    if num_states < 256:
        return 128  # don't inflate tiny feature dims
    try:
        kind = jax.devices()[0].device_kind.lower()
    except Exception:
        return 128
    for old in ("v2", "v3", "v4", "v5"):
        if old in kind:
            return 128
    return 256


def dqn_kernel(x_ref, w1_ref, b1_ref, w2_ref, b2_ref, out_ref):
    # Two bf16 MXU matmuls with f32 accumulation; bias-add / ReLU epilogue in
    # f32 on the VPU; single fused store of the final result.
    x = x_ref[...].astype(jnp.bfloat16)                       # (TB, S)
    h = jnp.dot(x, w1_ref[...],
                preferred_element_type=jnp.float32)           # (TB, Sn) f32
    h = jnp.maximum(h + b1_ref[...], 0.0)                     # bias + ReLU (f32)
    q = jnp.dot(h.astype(jnp.bfloat16), w2_ref[...],
                preferred_element_type=jnp.float32)           # (TB, A) f32
    out_ref[...] = (q + b2_ref[...]).astype(out_ref.dtype)


def prep_params(w1, b1, w2, b2, *, lane=None):
    """One-time parameter prep (hoist out of the per-call forward path).

    w1: (S, S), b1: (S,), w2: (A, S), b2: (A,)  -- PyTorch (out, in) layout.
    Returns (w1_t, b1_r, w2_t, b2_r):
      w1_t: (S,  Sn) bf16   (transposed, N padded to the lane multiple)
      b1_r: (1,  Sn) f32
      w2_t: (Sn, A)  bf16   (transposed, K padded to match)
      b2_r: (1,  A)  f32
    Zero padding provably contributes nothing to valid outputs.
    """
    S = w1.shape[1]
    A = w2.shape[0]
    if lane is None:
        lane = _pick_lane(S)
    S_n = _round_up(S, lane)

    w1_t = jnp.pad(w1.T, ((0, 0), (0, S_n - S))).astype(jnp.bfloat16)
    w2_t = jnp.pad(w2.T, ((0, S_n - S), (0, 0))).astype(jnp.bfloat16)
    b1_r = jnp.pad(b1, (0, S_n - S)).reshape(1, S_n).astype(jnp.float32)
    b2_r = b2.reshape(1, A).astype(jnp.float32)
    return w1_t, b1_r, w2_t, b2_r


def deep_q_network(x, w1_t, b1_r, w2_t, b2_r, *, batch_tile=256):
    """DQN forward pass.

    x:    (B, S) float32
    w1_t, b1_r, w2_t, b2_r: output of prep_params()
    returns (B, A) float32
    """
    B, S = x.shape
    S_n = w1_t.shape[1]
    A = w2_t.shape[1]
    assert w1_t.shape[0] == S, "prep_params feature dim mismatch with x"

    # Batch tile: multiple of 8 (sublane), capped near ceil(B/2) so the
    # parallel batch axis splits across both TensorCores on v7x.
    if B <= 8:
        bt = B                      # full-dim block, exempt from the 8-row rule
    else:
        bt = min(batch_tile, max(8, _round_up(-(-B // 2), 8)))
    grid = (pl.cdiv(B, bt),)        # ragged tail handled by edge-block masking

    # Explicit VMEM budget (x/out double-buffered, weights single-buffered,
    # f32+bf16 hidden intermediate) with 2x headroom.
    vmem_bytes = (
        2 * bt * S * 4              # x tiles (f32, double-buffered)
        + S * S_n * 2               # w1^T (bf16, single-buffered)
        + S_n * A * 2               # w2^T (bf16, single-buffered)
        + (S_n + A) * 4             # bias rows (f32)
        + 2 * bt * A * 4            # out tiles (f32, double-buffered)
        + 3 * bt * S_n * 4          # hidden intermediate (f32 + bf16 copies)
    )
    vmem_limit = int(min(max(2 * vmem_bytes, 32 * 1024 * 1024),
                         64 * 1024 * 1024))

    cost = pl.CostEstimate(
        flops=2 * B * (S * S_n + S_n * A),
        transcendentals=0,
        bytes_accessed=(B * S * 4 + S * S_n * 2 + S_n * A * 2
                        + (S_n + A) * 4 + B * A * 4),
    )

    return pl.pallas_call(
        dqn_kernel,
        out_shape=jax.ShapeDtypeStruct((B, A), x.dtype),
        grid_spec=pl.GridSpec(
            grid=grid,
            in_specs=[
                # x tile: true (unpadded) feature dim, double-buffered.
                pl.BlockSpec((bt, S), lambda i: (i, 0)),
                # Weights / biases: constant index_map -> single buffer.
                pl.BlockSpec((S, S_n), lambda i: (0, 0),
                             pipeline_mode=pl.Buffered(1)),
                pl.BlockSpec((1, S_n), lambda i: (0, 0),
                             pipeline_mode=pl.Buffered(1)),
                pl.BlockSpec((S_n, A), lambda i: (0, 0),
                             pipeline_mode=pl.Buffered(1)),
                pl.BlockSpec((1, A), lambda i: (0, 0),
                             pipeline_mode=pl.Buffered(1)),
            ],
            out_specs=pl.BlockSpec((bt, A), lambda i: (i, 0)),
        ),
        compiler_params=pltpu.CompilerParams(
            dimension_semantics=("parallel",),
            vmem_limit_bytes=vmem_limit,
        ),
        cost_estimate=cost,
    )(x, w1_t, b1_r, w2_t, b2_r)


def init_params(key, num_states, num_actions):
    # PyTorch-Linear-style init: U(-1/sqrt(fan_in), +1/sqrt(fan_in)).
    k1, k2, k3, k4 = jax.random.split(key, 4)
    bound = 1.0 / jnp.sqrt(jnp.float32(num_states))
    w1 = jax.random.uniform(k1, (num_states, num_states), jnp.float32,
                            -bound, bound)
    b1 = jax.random.uniform(k2, (num_states,), jnp.float32, -bound, bound)
    w2 = jax.random.uniform(k3, (num_actions, num_states), jnp.float32,
                            -bound, bound)
    b2 = jax.random.uniform(k4, (num_actions,), jnp.float32, -bound, bound)
    return w1, b1, w2, b2


def reference(x, w1, b1, w2, b2):
    h = jnp.maximum(x @ w1.T + b1, 0.0)
    return h @ w2.T + b2


if __name__ == "__main__":
    key = jax.random.PRNGKey(0)
    k_params, k_x = jax.random.split(key)

    batch = 8
    num_states = 32
    num_actions = 4

    w1, b1, w2, b2 = init_params(k_params, num_states, num_actions)
    x = jax.random.normal(k_x, (batch, num_states), jnp.float32)

    # One-time parameter prep (transpose / pad / bf16 cast), then the forward
    # pass touches only x.
    w1_t, b1_r, w2_t, b2_r = prep_params(w1, b1, w2, b2)

    out = deep_q_network(x, w1_t, b1_r, w2_t, b2_r)
    out = jax.block_until_ready(out)

    ref = reference(x, w1, b1, w2, b2)
    assert out.shape == (batch, num_actions)
    # bf16 matmul inputs with f32 accumulation: tolerance loosened vs pure f32.
    assert jnp.allclose(out, ref, atol=2e-2, rtol=2e-2), "mismatch vs reference"

    print("KERNEL_OK")
</pallas_src>

<mosaic_0001>
module attributes {stable_mosaic.version = 11 : i64} {
  func.func @dqn_kernel(%arg0: i32, %arg1: memref<8x32xf32, #tpu.memory_space<vmem>>, %arg2: memref<32x128xbf16, #tpu.memory_space<vmem>>, %arg3: memref<1x128xf32, #tpu.memory_space<vmem>>, %arg4: memref<128x4xbf16, #tpu.memory_space<vmem>>, %arg5: memref<1x4xf32, #tpu.memory_space<vmem>>, %arg6: memref<8x4xf32, #tpu.memory_space<vmem>>) attributes {dimension_semantics = [#tpu.dimension_semantics<parallel>], iteration_bounds = array<i64: 1>, scalar_prefetch = 0 : i64, scratch_operands = 0 : i64, tpu.core_type = #tpu.core_type<tc>, window_params = [{transform_indices = @transform_0, window_bounds = array<i64: 8, 32>}, {pipeline_mode = #tpu.pipeline_mode<synchronous>, transform_indices = @transform_1, window_bounds = array<i64: 32, 128>}, {pipeline_mode = #tpu.pipeline_mode<synchronous>, transform_indices = @transform_2, window_bounds = array<i64: 1, 128>}, {pipeline_mode = #tpu.pipeline_mode<synchronous>, transform_indices = @transform_3, window_bounds = array<i64: 128, 4>}, {pipeline_mode = #tpu.pipeline_mode<synchronous>, transform_indices = @transform_4, window_bounds = array<i64: 1, 4>}, {transform_indices = @transform_5, window_bounds = array<i64: 8, 4>}]} {
    %c0 = arith.constant 0 : index
    %c0_0 = arith.constant 0 : index
    %0 = vector.load %arg1[%c0, %c0_0] : memref<8x32xf32, #tpu.memory_space<vmem>>, vector<8x32xf32>
    %1 = arith.truncf %0 : vector<8x32xf32> to vector<8x32xbf16>
    %c0_1 = arith.constant 0 : index
    %c0_2 = arith.constant 0 : index
    %2 = vector.load %arg2[%c0_1, %c0_2] : memref<32x128xbf16, #tpu.memory_space<vmem>>, vector<32x128xbf16>
    %cst = arith.constant dense<0.000000e+00> : vector<8x128xf32>
    %3 = tpu.matmul %1, %2, %cst {dimension_numbers = #tpu.dot_dimension_numbers<[1], [0], [0], [1], [0, 0, 1, 1], [], []>} : vector<8x32xbf16>, vector<32x128xbf16>, vector<8x128xf32> -> vector<8x128xf32>
    %c0_3 = arith.constant 0 : index
    %c0_4 = arith.constant 0 : index
    %4 = vector.load %arg3[%c0_3, %c0_4] : memref<1x128xf32, #tpu.memory_space<vmem>>, vector<1x128xf32>
    %5 = vector.broadcast %4 : vector<1x128xf32> to vector<8x128xf32>
    %6 = arith.addf %3, %5 : vector<8x128xf32>
    %cst_5 = arith.constant 0.000000e+00 : f32
    %7 = vector.broadcast %cst_5 : f32 to vector<8x128xf32>
    %8 = arith.maximumf %6, %7 : vector<8x128xf32>
    %9 = arith.truncf %8 : vector<8x128xf32> to vector<8x128xbf16>
    %c0_6 = arith.constant 0 : index
    %c0_7 = arith.constant 0 : index
    %10 = vector.load %arg4[%c0_6, %c0_7] : memref<128x4xbf16, #tpu.memory_space<vmem>>, vector<128x4xbf16>
    %cst_8 = arith.constant dense<0.000000e+00> : vector<8x4xf32>
    %11 = tpu.matmul %9, %10, %cst_8 {dimension_numbers = #tpu.dot_dimension_numbers<[1], [0], [0], [1], [0, 0, 1, 1], [], []>} : vector<8x128xbf16>, vector<128x4xbf16>, vector<8x4xf32> -> vector<8x4xf32>
    %c0_9 = arith.constant 0 : index
    %c0_10 = arith.constant 0 : index
    %12 = vector.load %arg5[%c0_9, %c0_10] : memref<1x4xf32, #tpu.memory_space<vmem>>, vector<1x4xf32>
    %13 = vector.broadcast %12 : vector<1x4xf32> to vector<8x4xf32>
    %14 = arith.addf %11, %13 : vector<8x4xf32>
    %c0_11 = arith.constant 0 : index
    %c0_12 = arith.constant 0 : index
    %15 = vector.load %arg6[%c0_11, %c0_12] : memref<8x4xf32, #tpu.memory_space<vmem>>, vector<8x4xf32>
    tpu.vector_store %arg6[%c0_11, %c0_12], %14 {strides = array<i32>} : memref<8x4xf32, #tpu.memory_space<vmem>>, vector<8x4xf32>,
    return
  }
  func.func @transform_0(%arg0: i32) -> (i32, i32) {
    %c0_i32 = arith.constant 0 : i32
    %c0_i32_0 = arith.constant 0 : i32
    return %arg0, %c0_i32 : i32, i32
  }
  func.func @transform_1(%arg0: i32) -> (i32, i32) {
    %c0_i32 = arith.constant 0 : i32
    %c0_i32_0 = arith.constant 0 : i32
    %c0_i32_1 = arith.constant 0 : i32
    return %c0_i32, %c0_i32_0 : i32, i32
  }
  func.func @transform_2(%arg0: i32) -> (i32, i32) {
    %c0_i32 = arith.constant 0 : i32
    %c0_i32_0 = arith.constant 0 : i32
    %c0_i32_1 = arith.constant 0 : i32
    return %c0_i32, %c0_i32_0 : i32, i32
  }
  func.func @transform_3(%arg0: i32) -> (i32, i32) {
    %c0_i32 = arith.constant 0 : i32
    %c0_i32_0 = arith.constant 0 : i32
    %c0_i32_1 = arith.constant 0 : i32
    return %c0_i32, %c0_i32_0 : i32, i32
  }
  func.func @transform_4(%arg0: i32) -> (i32, i32) {
    %c0_i32 = arith.constant 0 : i32
    %c0_i32_0 = arith.constant 0 : i32
    %c0_i32_1 = arith.constant 0 : i32
    return %c0_i32, %c0_i32_0 : i32, i32
  }
  func.func @transform_5(%arg0: i32) -> (i32, i32) {
    %c0_i32 = arith.constant 0 : i32
    %c0_i32_0 = arith.constant 0 : i32
    return %arg0, %c0_i32 : i32, i32
  }
}

</mosaic_0001>

<llo_original>
// kernel: tpu_custom_call.1
$region0: #{tpu_custom_call.1}
  #allocation0 [shape = 'u32[]', space=smem, size = 0x4, offset = 0x4, fixed_abs, tag = 'smem constant byte address 0x4 - core index']
  #allocation1 [shape = 'u32[144,128]{1,0:T(1,128)}', space=vmem, size = 0x12000, scoped, tag = 'internal scratch']
  %s0 = inlined_call_operand.vmem [shape: f32[8,32], index: 0, kind: input, shape index: {}]
  %s1 = inlined_call_operand.vmem [shape: bf16[32,128], index: 1, kind: input, shape index: {}]
  %s2 = inlined_call_operand.vmem [shape: f32[1,128], index: 2, kind: input, shape index: {}]
  %s3 = inlined_call_operand.vmem [shape: bf16[128,4], index: 3, kind: input, shape index: {}]
  %s4 = inlined_call_operand.vmem [shape: f32[1,4], index: 4, kind: input, shape index: {}]
  %s5 = inlined_call_operand.vmem [shape: f32[8,4], index: 5, kind: output, shape index: {}]
  %s6 = sld [smem:[#allocation0]]
  $region30: #{tpu_custom_call.1} parent=0
    _
  %s8 = ssub.s32 1, %s6
  %s9 = scalar_select 0, %s8, %s6
  // Predicated region
  $region2: #{tpu_custom_call.1} parent=0 // pred_check
    _
  $region3: #{tpu_custom_call.1} parent=0 // pred_check_branch
    %11 = sbr.rel (0) target = $region5
  $region4: #{tpu_custom_call.1} parent=0 // pred_region
    _
  $region5: #{tpu_custom_call.1} parent=0 // pred_fallthru
    _
  // Predicated region
  $region6: #{tpu_custom_call.1} parent=0 // pred_check
    _
  $region7: #{tpu_custom_call.1} parent=0 // pred_check_branch
    %13 = sbr.rel (0) target = $region9
  $region8: #{tpu_custom_call.1} parent=0 // pred_region
    _
  $region9: #{tpu_custom_call.1} parent=0 // pred_fallthru
    _
  // Predicated region
  $region10: #{tpu_custom_call.1} parent=0 // pred_check
    _
  $region11: #{tpu_custom_call.1} parent=0 // pred_check_branch
    %15 = sbr.rel (0) target = $region13
  $region12: #{tpu_custom_call.1} parent=0 // pred_region
    _
  $region13: #{tpu_custom_call.1} parent=0 // pred_fallthru
    _
  // Predicated region
  $region14: #{tpu_custom_call.1} parent=0 // pred_check
    _
  $region15: #{tpu_custom_call.1} parent=0 // pred_check_branch
    %17 = sbr.rel (0) target = $region17
  $region16: #{tpu_custom_call.1} parent=0 // pred_region
    _
  $region17: #{tpu_custom_call.1} parent=0 // pred_fallthru
    _
  // Predicated region
  $region18: #{tpu_custom_call.1} parent=0 // pred_check
    _
  $region19: #{tpu_custom_call.1} parent=0 // pred_check_branch
    %19 = sbr.rel (0) target = $region21
  $region20: #{tpu_custom_call.1} parent=0 // pred_region
    _
  $region21: #{tpu_custom_call.1} parent=0 // pred_fallthru
    _
  %v21 = vld [vmem:[%s0] sm:$0xff]
  %v22 = vpack.c.bf16 %v21, %v21
  %v23 = vld [vmem:[%s1] sm:$0xf]
  %v24 = vld [vmem:[%s1 + $0x4] sm:$0xf]
  %v25 = vld [vmem:[%s1 + $0x8] sm:$0xf]
  %v26 = vld [vmem:[%s1 + $0xc] sm:$0xf]
  %v27 = vld [vmem:[%s2] sm:$0x1]
  %v29 = vlaneseq
  %v30 = vshrl.u32 %v29, 7
  %v31 = vsub.s32 0, %v30
  %v32 = vrot.slane %v27, %v31
  %v38 = vunpack.c.l.b16 %v23
  %v39 = vunpack.c.l.b16 %v24
  %v40 = vunpack.c.l.b16 %v25
  %v41 = vunpack.c.l.b16 %v26
  %v42 = vpack.c.b16 %v39, %v38
  %v43 = vpack.c.b16 %v41, %v40
  %vm46 = vcmask 261120
  %v48 = vsel %vm46, %v22, 0
  %50 = vmatprep.subr.bf16.mxu0 0
  %51 = vmatpush1.bf16.msra.mxu0 %v42
  %52 = vmatprep.subr.bf16.mxu0 0
  %53 = vmatpush1.bf16.msra.mxu0 %v43
  %54 = vmatprep.subr.bf16.mxu0 0
  %55 = vmatpush1.bf16.msra.mxu0 0
  %56 = vmatprep.subr.bf16.mxu0 0
  %57 = vmatpush1.bf16.msra.mxu0 0
  %58 = vmatprep.subr.bf16.mxu0 0
  %59 = vmatpush1.bf16.msra.mxu0 0
  %60 = vmatprep.subr.bf16.mxu0 0
  %61 = vmatpush1.bf16.msra.mxu0 0
  %62 = vmatprep.subr.bf16.mxu0 0
  %63 = vmatpush1.bf16.msra.mxu0 0
  %64 = vmatprep.subr.bf16.mxu0 0
  %65 = vmatpush1.bf16.msra.mxu0 0
  %66 = vmatprep.subr.bf16.mxu0 0
  %67 = vmatpush1.bf16.msra.mxu0 0
  %68 = vmatprep.subr.bf16.mxu0 0
  %69 = vmatpush1.bf16.msra.mxu0 0
  %70 = vmatprep.subr.bf16.mxu0 0
  %71 = vmatpush1.bf16.msra.mxu0 0
  %72 = vmatprep.subr.bf16.mxu0 0
  %73 = vmatpush1.bf16.msra.mxu0 0
  %74 = vmatprep.subr.bf16.mxu0 0
  %75 = vmatpush1.bf16.msra.mxu0 0
  %76 = vmatprep.subr.bf16.mxu0 0
  %77 = vmatpush1.bf16.msra.mxu0 0
  %78 = vmatprep.subr.bf16.mxu0 0
  %79 = vmatpush1.bf16.msra.mxu0 0
  %80 = vmatprep.subr.bf16.mxu0 0
  %81 = vmatpush1.bf16.msra.mxu0 0
  %82 = vmatprep.mubr.bf16.mxu0 0
  %83 = vmatmul.mubr.bf16.gmra.mrb[0].mxu0 %v48
  %v84 = vpop.f32.mrb[0].mxu0
  %v85 = vadd.f32 %v32, %v84
  %v86 = vpop.f32.mrb[0].mxu0
  %v87 = vpop.f32.mrb[0].mxu0
  %v88 = vpop.f32.mrb[0].mxu0
  %89 = vdwg.mxu0
  %v90 = vmax.f32 %v85, 0.0
  %v91 = vpack.c.bf16 %v90, %v90
  %v92 = vld [vmem:[%s3] sm:$0xf]
  %v93 = vld [vmem:[%s3 + $0x4] sm:$0xf]
  %v94 = vld [vmem:[%s3 + $0x8] sm:$0xf]
  %v95 = vld [vmem:[%s3 + $0xc] sm:$0xf]
  %v96 = vld [vmem:[%s3 + $0x10] sm:$0xf]
  %v97 = vld [vmem:[%s3 + $0x14] sm:$0xf]
  %v98 = vld [vmem:[%s3 + $0x18] sm:$0xf]
  %v99 = vld [vmem:[%s3 + $0x1c] sm:$0xf]
  %v100 = vld [vmem:[%s3 + $0x20] sm:$0xf]
  %v101 = vld [vmem:[%s3 + $0x24] sm:$0xf]
  %v102 = vld [vmem:[%s3 + $0x28] sm:$0xf]
  %v103 = vld [vmem:[%s3 + $0x2c] sm:$0xf]
  %v104 = vld [vmem:[%s3 + $0x30] sm:$0xf]
  %v105 = vld [vmem:[%s3 + $0x34] sm:$0xf]
  %v106 = vld [vmem:[%s3 + $0x38] sm:$0xf]
  %v107 = vld [vmem:[%s3 + $0x3c] sm:$0xf]
  %v108 = vld [vmem:[%s4] sm:$0x1]
  %v110 = vlaneseq
  %v111 = vshrl.u32 %v110, 7
  %v112 = vsub.s32 0, %v111
  %v113 = vrot.slane %v108, %v112
  %v131 = vunpack.c.l.b16 %v92
  %v132 = vunpack.c.l.b16 %v93
  %v133 = vunpack.c.l.b16 %v94
  %v134 = vunpack.c.l.b16 %v95
  %v135 = vunpack.c.l.b16 %v96
  %v136 = vunpack.c.l.b16 %v97
  %v137 = vunpack.c.l.b16 %v98
  %v138 = vunpack.c.l.b16 %v99
  %v139 = vunpack.c.l.b16 %v100
  %v140 = vunpack.c.l.b16 %v101
  %v141 = vunpack.c.l.b16 %v102
  %v142 = vunpack.c.l.b16 %v103
  %v143 = vunpack.c.l.b16 %v104
  %v144 = vunpack.c.l.b16 %v105
  %v145 = vunpack.c.l.b16 %v106
  %v146 = vunpack.c.l.b16 %v107
  %v147 = vpack.c.b16 %v132, %v131
  %v148 = vpack.c.b16 %v134, %v133
  %v149 = vpack.c.b16 %v136, %v135
  %v150 = vpack.c.b16 %v138, %v137
  %v151 = vpack.c.b16 %v140, %v139
  %v152 = vpack.c.b16 %v142, %v141
  %v153 = vpack.c.b16 %v144, %v143
  %v154 = vpack.c.b16 %v146, %v145
  %163 = vmatprep.subr.bf16.mxu0 0
  %164 = vmatpush1.bf16.msra.mxu0 %v147
  %165 = vmatprep.subr.bf16.mxu0 0
  %166 = vmatpush1.bf16.msra.mxu0 %v148
  %167 = vmatprep.subr.bf16.mxu0 0
  %168 = vmatpush1.bf16.msra.mxu0 %v149
  %169 = vmatprep.subr.bf16.mxu0 0
  %170 = vmatpush1.bf16.msra.mxu0 %v150
  %171 = vmatprep.subr.bf16.mxu0 0
  %172 = vmatpush1.bf16.msra.mxu0 %v151
  %173 = vmatprep.subr.bf16.mxu0 0
  %174 = vmatpush1.bf16.msra.mxu0 %v152
  %175 = vmatprep.subr.bf16.mxu0 0
  %176 = vmatpush1.bf16.msra.mxu0 %v153
  %177 = vmatprep.subr.bf16.mxu0 0
  %178 = vmatpush1.bf16.msra.mxu0 %v154
  %179 = vmatprep.subr.bf16.mxu0 0
  %180 = vmatpush1.bf16.msra.mxu0 0
  %181 = vmatprep.subr.bf16.mxu0 0
  %182 = vmatpush1.bf16.msra.mxu0 0
  %183 = vmatprep.subr.bf16.mxu0 0
  %184 = vmatpush1.bf16.msra.mxu0 0
  %185 = vmatprep.subr.bf16.mxu0 0
  %186 = vmatpush1.bf16.msra.mxu0 0
  %187 = vmatprep.subr.bf16.mxu0 0
  %188 = vmatpush1.bf16.msra.mxu0 0
  %189 = vmatprep.subr.bf16.mxu0 0
  %190 = vmatpush1.bf16.msra.mxu0 0
  %191 = vmatprep.subr.bf16.mxu0 0
  %192 = vmatpush1.bf16.msra.mxu0 0
  %193 = vmatprep.subr.bf16.mxu0 0
  %194 = vmatpush1.bf16.msra.mxu0 0
  %195 = vmatprep.mubr.bf16.mxu0 0
  %196 = vmatmul.mubr.bf16.gmra.mrb[0].mxu0 %v91
  %v197 = vpop.f32.mrb[0].mxu0
  %v198 = vadd.f32 %v113, %v197
  %v199 = vpop.f32.mrb[0].mxu0
  %v200 = vpop.f32.mrb[0].mxu0
  %v201 = vpop.f32.mrb[0].mxu0
  %202 = vdwg.mxu0
  %vm203 = vcmask 31744
  %204 = vst.msk [vmem:[%s5] sm:$0xff] %vm203, %v198
  // Predicated region
  $region22: #{tpu_custom_call.1} parent=0 // pred_check
    _
  $region23: #{tpu_custom_call.1} parent=0 // pred_check_branch
    %206 = sbr.rel (0) target = $region25
  $region24: #{tpu_custom_call.1} parent=0 // pred_region
    _
  $region25: #{tpu_custom_call.1} parent=0 // pred_fallthru
    _
  // Predicated region
  $region26: #{tpu_custom_call.1} parent=0 // pred_check
    _
  $region27: #{tpu_custom_call.1} parent=0 // pred_check_branch
    %208 = sbr.rel (0) target = $region29
  $region28: #{tpu_custom_call.1} parent=0 // pred_region
    _
  $region29: #{tpu_custom_call.1} parent=0 // pred_fallthru
    _

</llo_original>
